<compile_context>
chip_gen: v5e
topology: v5e:2x2
jax: 0.10.0
libtpu: 0.0.40
codegen_flags: <defaults>
</compile_context>

<pallas_src>
import jax
import jax.numpy as jnp
from jax.experimental import pallas as pl
from jax.experimental.pallas import tpu as pltpu


# ----------------------------- kernels ------------------------------------- #

def _add_scalar_std_kernel(std_ref, x_ref, n_ref, o_ref):
    # std_ref: SMEM (1,) f32; x_ref/o_ref: (NB, C, T); n_ref: (NB, 1, T)
    s = std_ref[0].astype(x_ref.dtype)
    o_ref[...] = x_ref[...] + s * n_ref[...]


def _add_vector_std_kernel(std_ref, x_ref, n_ref, o_ref):
    # std_ref: VMEM (1, C, 1); broadcast once per tile, fused scale+add.
    std = std_ref[...].astype(x_ref.dtype)
    o_ref[...] = x_ref[...] + std * n_ref[...]


def _cat_kernel(x_ref, n_ref, o_ref):
    # o_ref: (NB, C+1, T); passthrough x to the first C channels, noise to the last.
    C = x_ref.shape[1]
    o_ref[:, 0:C, :] = x_ref[...]
    o_ref[:, C:C + 1, :] = n_ref[...].astype(o_ref.dtype)


# ----------------------------- tiling -------------------------------------- #

def _choose_tiles(N, C, HW, out_C, itemsize, budget_bytes=12 * 1024 * 1024):
    """Pick (NB, T): batch elements per grid step and the spatial (lane) tile.

    T is a multiple of 128 that divides HW (or HW itself when HW % 128 != 0, which
    satisfies the 'full extent' tiling rule). NB divides N. The per-step block bytes
    (x + noise + out) stay under budget_bytes, so the double-buffered pipeline fits
    scoped VMEM on v5e/v6e/v7x with headroom (vmem_limit set to 32 MiB below).
    """
    per_lane = (C + out_C + 1) * itemsize  # bytes per spatial element per batch elem
    if HW % 128 == 0:
        max_lanes = max(128, budget_bytes // per_lane)
        if HW <= max_lanes:
            T = HW
        else:
            T = 128  # always valid since 128 | HW
            for nt in range(2, HW // 128 + 1):
                cand = HW // nt
                if HW % nt == 0 and cand % 128 == 0 and cand <= max_lanes:
                    T = cand
                    break
    else:
        T = HW  # full extent (small spatial); satisfies the (8,128)-or-full rule

    NB = 1
    if T == HW:  # per-batch slab is small: group batch elements per step
        for nb in range(2, N + 1):
            if N % nb == 0 and nb * per_lane * T <= budget_bytes:
                NB = nb
    return NB, T


# ----------------------------- wrapper -------------------------------------- #

def add_noise(x, std=None, *, cat, key):
    """Pallas implementation of AddNoise.forward.

    x:   (N, C, H, W)
    std: (chan,) with chan in {1, C}; required iff cat=False.
    key: jax PRNG key used to draw the noise for this call.
    """
    N, C, H, W = x.shape
    HW = H * W
    itemsize = x.dtype.itemsize

    # noise ~ randn_like(x[:, :1]), lane-dense flattened layout (N, 1, HW)
    noise = jax.random.normal(key, (N, 1, HW), dtype=jnp.float32).astype(x.dtype)
    xf = x.reshape(N, C, HW)

    out_C = C + 1 if cat else C
    NB, T = _choose_tiles(N, C, HW, out_C, itemsize)
    grid = (N // NB, HW // T)

    x_spec = pl.BlockSpec((NB, C, T), lambda b, s: (b, 0, s))
    n_spec = pl.BlockSpec((NB, 1, T), lambda b, s: (b, 0, s))
    o_spec = pl.BlockSpec((NB, out_C, T), lambda b, s: (b, 0, s))

    cparams = pltpu.CompilerParams(
        dimension_semantics=("parallel", "parallel"),
        vmem_limit_bytes=32 * 1024 * 1024,
    )

    if cat:
        out = pl.pallas_call(
            _cat_kernel,
            out_shape=jax.ShapeDtypeStruct((N, out_C, HW), x.dtype),
            grid=grid,
            in_specs=[x_spec, n_spec],
            out_specs=o_spec,
            compiler_params=cparams,
        )(xf, noise)
        return out.reshape(N, out_C, H, W)

    assert std is not None
    chan = std.shape[0]
    assert chan in (1, C), "chan must be 1 (StyleGAN2) or C (StyleGAN)"

    if chan == 1:
        # scalar std lives in SMEM: no degenerate VMEM pipeline buffer for it
        std_arg = std.astype(jnp.float32)
        std_spec = pl.BlockSpec(memory_space=pltpu.MemorySpace.SMEM)
        kernel = _add_scalar_std_kernel
    else:
        std_arg = std.astype(jnp.float32).reshape(1, C, 1)
        std_spec = pl.BlockSpec((1, C, 1), lambda b, s: (0, 0, 0))
        kernel = _add_vector_std_kernel

    out = pl.pallas_call(
        kernel,
        out_shape=jax.ShapeDtypeStruct((N, C, HW), x.dtype),
        grid=grid,
        in_specs=[std_spec, x_spec, n_spec],
        out_specs=o_spec,
        compiler_params=cparams,
    )(std_arg, xf, noise)
    return out.reshape(N, C, H, W)


# ----------------------------- demo / checks -------------------------------- #

if __name__ == "__main__":
    root = jax.random.PRNGKey(0)
    k_x, k_n1, k_n2, k_n3 = jax.random.split(root, 4)

    N, C, H, W = 2, 4, 16, 16
    x = jax.random.normal(k_x, (N, C, H, W), dtype=jnp.float32)

    def ref_noise(key):
        # same draw the wrapper makes, for reference comparison
        return jax.random.normal(key, (N, 1, H * W), dtype=jnp.float32
                                 ).astype(x.dtype).reshape(N, 1, H, W)

    # cat=False, chan=1 (StyleGAN2): std init matches nn.Parameter(torch.zeros([1]))
    std1 = jnp.zeros((1,), dtype=jnp.float32)
    y1 = add_noise(x, std1, cat=False, key=k_n1)
    jax.block_until_ready(y1)
    assert y1.shape == (N, C, H, W)
    assert bool(jnp.allclose(y1, x))  # std == 0 -> exact passthrough

    # cat=False, chan=C (StyleGAN) with nonzero per-channel std
    stdc = jnp.arange(1, C + 1, dtype=jnp.float32) * 0.1
    y2 = add_noise(x, stdc, cat=False, key=k_n2)
    jax.block_until_ready(y2)
    exp2 = x + stdc.reshape(1, C, 1, 1) * ref_noise(k_n2)
    assert bool(jnp.allclose(y2, exp2, atol=1e-6))

    # cat=True: concatenate one noise channel
    y3 = add_noise(x, cat=True, key=k_n3)
    jax.block_until_ready(y3)
    assert y3.shape == (N, C + 1, H, W)
    assert bool(jnp.allclose(y3[:, :C], x))
    assert bool(jnp.allclose(y3[:, C:], ref_noise(k_n3)))

    print("KERNEL_OK")
</pallas_src>

<mosaic_0001>
module attributes {stable_mosaic.version = 11 : i64} {
  func.func @_add_scalar_std_kernel(%arg0: i32, %arg1: i32, %arg2: memref<1xf32, #tpu.memory_space<smem>>, %arg3: memref<2x4x256xf32, #tpu.memory_space<vmem>>, %arg4: memref<2x1x256xf32, #tpu.memory_space<vmem>>, %arg5: memref<2x4x256xf32, #tpu.memory_space<vmem>>) attributes {dimension_semantics = [#tpu.dimension_semantics<parallel>, #tpu.dimension_semantics<parallel>], iteration_bounds = array<i64: 1, 1>, scalar_prefetch = 0 : i64, scratch_operands = 0 : i64, tpu.core_type = #tpu.core_type<tc>, window_params = [{transform_indices = @transform_0, window_bounds = array<i64: 1>}, {transform_indices = @transform_1, window_bounds = array<i64: 2, 4, 256>}, {transform_indices = @transform_2, window_bounds = array<i64: 2, 1, 256>}, {transform_indices = @transform_3, window_bounds = array<i64: 2, 4, 256>}]} {
    %c0 = arith.constant 0 : index
    %0 = memref.load %arg2[%c0] : memref<1xf32, #tpu.memory_space<smem>>
    %c0_0 = arith.constant 0 : index
    %c0_1 = arith.constant 0 : index
    %c0_2 = arith.constant 0 : index
    %1 = vector.load %arg3[%c0_0, %c0_1, %c0_2] : memref<2x4x256xf32, #tpu.memory_space<vmem>>, vector<2x4x256xf32>
    %c0_3 = arith.constant 0 : index
    %c0_4 = arith.constant 0 : index
    %c0_5 = arith.constant 0 : index
    %2 = vector.load %arg4[%c0_3, %c0_4, %c0_5] : memref<2x1x256xf32, #tpu.memory_space<vmem>>, vector<2x1x256xf32>
    %3 = vector.broadcast %0 : f32 to vector<2x1x256xf32>
    %4 = arith.mulf %3, %2 : vector<2x1x256xf32>
    %5 = vector.broadcast %4 : vector<2x1x256xf32> to vector<2x4x256xf32>
    %6 = arith.addf %1, %5 : vector<2x4x256xf32>
    %c0_6 = arith.constant 0 : index
    %c0_7 = arith.constant 0 : index
    %c0_8 = arith.constant 0 : index
    %7 = vector.load %arg5[%c0_6, %c0_7, %c0_8] : memref<2x4x256xf32, #tpu.memory_space<vmem>>, vector<2x4x256xf32>
    tpu.vector_store %arg5[%c0_6, %c0_7, %c0_8], %6 {strides = array<i32>} : memref<2x4x256xf32, #tpu.memory_space<vmem>>, vector<2x4x256xf32>,
    return
  }
  func.func @transform_0(%arg0: i32, %arg1: i32) -> i32 {
    %c0_i32 = arith.constant 0 : i32
    %c0_i32_0 = arith.constant 0 : i32
    return %c0_i32 : i32
  }
  func.func @transform_1(%arg0: i32, %arg1: i32) -> (i32, i32, i32) {
    %c0_i32 = arith.constant 0 : i32
    %c0_i32_0 = arith.constant 0 : i32
    return %arg0, %c0_i32, %arg1 : i32, i32, i32
  }
  func.func @transform_2(%arg0: i32, %arg1: i32) -> (i32, i32, i32) {
    %c0_i32 = arith.constant 0 : i32
    %c0_i32_0 = arith.constant 0 : i32
    return %arg0, %c0_i32, %arg1 : i32, i32, i32
  }
  func.func @transform_3(%arg0: i32, %arg1: i32) -> (i32, i32, i32) {
    %c0_i32 = arith.constant 0 : i32
    %c0_i32_0 = arith.constant 0 : i32
    return %arg0, %c0_i32, %arg1 : i32, i32, i32
  }
}

</mosaic_0001>

<llo_original>
// kernel: tpu_custom_call.1
$region0: #{tpu_custom_call.1}
  #allocation0 [shape = 'u32[]', space=smem, size = 0x4, offset = 0x4, fixed_abs, tag = 'smem constant byte address 0x4 - core index']
  #allocation1 [shape = 'u32[72,128]{1,0:T(1,128)}', space=vmem, size = 0x9000, scoped, tag = 'internal scratch']
  #allocation2 [shape = 'f32[1]{0:T(128)S(6)}', space=smem, size = 0x200, scoped, tag = 'scoped memory for tpu_custom_call.1']
  %s0 = inlined_call_operand.<no memory space> [shape: f32[1], index: 0, kind: input, shape index: {}]
  %s1 = inlined_call_operand.hbm [shape: f32[2,4,256], index: 1, kind: input, shape index: {}]
  %s2 = inlined_call_operand.hbm [shape: f32[2,1,256], index: 2, kind: input, shape index: {}]
  %s3 = inlined_call_operand.hbm [shape: f32[2,4,256], index: 3, kind: output, shape index: {}]
  %s4 = sld [smem:[#allocation0]]
  $region30: #{tpu_custom_call.1} parent=0
    _
  %s6 = ssub.s32 1, %s4
  %s7 = scalar_select 0, %s6, %s4
  %8 = sst [smem:[#allocation2]] %s0
  $region1: #{tpu_custom_call.1} parent=0
    #allocation3 [shape = 'u8[8192]{0}', space=vmem, size = 0x2000, scoped, tag = 'input window, operand 1, single buffered']
    #allocation4 [shape = 's32[1]{0}', space=sflag, size = 0x4, scoped, tag = 'scoped memory for tpu_custom_call.1']
    #allocation5 [shape = 's32[1]{0}', space=sflag, size = 0x4, scoped, tag = 'scoped memory for tpu_custom_call.1']
    #allocation6 [shape = 'u8[2048]{0}', space=vmem, size = 0x800, scoped, tag = 'input window, operand 2, single buffered']
    #allocation7 [shape = 's32[1]{0}', space=sflag, size = 0x4, scoped, tag = 'scoped memory for tpu_custom_call.1']
    #allocation8 [shape = 'u8[8192]{0}', space=vmem, size = 0x2000, scoped, tag = 'output window, operand 0, single buffered']
    %9 = vsyncpa [#allocation4], 0
    %10 = vsyncpa [#allocation7], 0
    %11 = vsyncpa [#allocation5], 0
    // Predicated region
    $region2: #{tpu_custom_call.1} parent=1 // pred_check
      _
    $region3: #{tpu_custom_call.1} parent=1 // pred_check_branch
      %13 = sbr.rel (0) target = $region5
    $region4: #{tpu_custom_call.1} parent=1 // pred_region
      _
    $region5: #{tpu_custom_call.1} parent=1 // pred_fallthru
      _
    // Predicated region
    $region6: #{tpu_custom_call.1} parent=1 // pred_check
      _
    $region7: #{tpu_custom_call.1} parent=1 // pred_check_branch
      %15 = sbr.rel (0) target = $region9
    $region8: #{tpu_custom_call.1} parent=1 // pred_region
      %17 = vsyncadd [#allocation4], 0
      %s18 = sshll.u32 %s1, 4
      %s19 = int_to_ptr.hbm [resolvable:$true] %s18
      %s20 = sshll.u32 [#allocation3], 4
      %s21 = int_to_ptr.vmem [resolvable:$true] %s20
      %26 = dma.hbm_to_vmem [thread:$0]  %s19, 256, %s21, [#allocation4], 128, 128, 8
    $region9: #{tpu_custom_call.1} parent=1 // pred_fallthru
      _
    // Predicated region
    $region10: #{tpu_custom_call.1} parent=1 // pred_check
      _
    $region11: #{tpu_custom_call.1} parent=1 // pred_check_branch
      %28 = sbr.rel (0) target = $region13
    $region12: #{tpu_custom_call.1} parent=1 // pred_region
      %30 = vsyncadd [#allocation7], 0
      %s31 = sshll.u32 %s2, 4
      %s32 = int_to_ptr.hbm [resolvable:$true] %s31
      %s33 = sshll.u32 [#allocation6], 4
      %s34 = int_to_ptr.vmem [resolvable:$true] %s33
      %39 = dma.hbm_to_vmem [thread:$0]  %s32, 64, %s34, [#allocation7], 32, 32, 2
    $region13: #{tpu_custom_call.1} parent=1 // pred_fallthru
      _
    // Predicated region
    $region14: #{tpu_custom_call.1} parent=1 // pred_check
      _
    $region15: #{tpu_custom_call.1} parent=1 // pred_check_branch
      %41 = sbr.rel (0) target = $region17
    $region16: #{tpu_custom_call.1} parent=1 // pred_region
      %43 = dma.done [#allocation4], 256
    $region17: #{tpu_custom_call.1} parent=1 // pred_fallthru
      _
    // Predicated region
    $region18: #{tpu_custom_call.1} parent=1 // pred_check
      _
    $region19: #{tpu_custom_call.1} parent=1 // pred_check_branch
      %45 = sbr.rel (0) target = $region21
    $region20: #{tpu_custom_call.1} parent=1 // pred_region
      %47 = dma.done [#allocation7], 64
    $region21: #{tpu_custom_call.1} parent=1 // pred_fallthru
      _
    %s48 = sld [smem:[#allocation2]]
    %v49 = vld [vmem:[#allocation3] sm:$0xff]
    %v50 = vld [vmem:[#allocation3 + $0x8] sm:$0xff]
    %v51 = vld [vmem:[#allocation6] sm:$0x3]
    %v52 = vld [vmem:[#allocation6 + $0x2] sm:$0x3]
    %v53 = vstv %s48
    %v54 = vmul.f32 %v53, %v51
    %v55 = vmul.f32 %v53, %v52
    %v58 = vperm.slane %v54, 0
    %v59 = vperm.slane %v54, 1
    %v60 = vperm.slane %v55, 0
    %v61 = vperm.slane %v55, 1
    %v62 = vrot.slane %v59, 4
    %v63 = vrot.slane %v61, 4
    %vm64 = vcmask 1043456
    %v65 = vsel %vm64, %v58, %v62
    %v66 = vsel %vm64, %v60, %v63
    %v69 = vadd.f32 %v49, %v65
    %v70 = vadd.f32 %v50, %v66
    %71 = vst [vmem:[#allocation8] sm:$0xff] %v69
    %72 = vst [vmem:[#allocation8 + $0x8] sm:$0xff] %v70
    // Predicated region
    $region22: #{tpu_custom_call.1} parent=1 // pred_check
      _
    $region23: #{tpu_custom_call.1} parent=1 // pred_check_branch
      %74 = sbr.rel (0) target = $region25
    $region24: #{tpu_custom_call.1} parent=1 // pred_region
      %76 = vsyncadd [#allocation5], 0
      %s77 = sshll.u32 [#allocation8], 4
      %s78 = int_to_ptr.vmem [resolvable:$true] %s77
      %s79 = sshll.u32 %s3, 4
      %s80 = int_to_ptr.hbm [resolvable:$true] %s79
      %85 = dma.vmem_to_hbm [thread:$0]  %s78, 256, %s80, [#allocation5], 128, 128, 8
    $region25: #{tpu_custom_call.1} parent=1 // pred_fallthru
      _
    // Predicated region
    $region26: #{tpu_custom_call.1} parent=1 // pred_check
      _
    $region27: #{tpu_custom_call.1} parent=1 // pred_check_branch
      %87 = sbr.rel (0) target = $region29
    $region28: #{tpu_custom_call.1} parent=1 // pred_region
      %89 = dma.done [#allocation5], 256
    $region29: #{tpu_custom_call.1} parent=1 // pred_fallthru
      _
    %90 = vsyncpa [#allocation4], 1
    %91 = vsyncpa [#allocation7], 1
    %92 = vsyncpa [#allocation5], 1

</llo_original>
